<compile_context>
chip_gen: v7x
topology: tpu7x:2x2x1
jax: 0.10.0
libtpu: 0.0.40
codegen_flags: <defaults>
</compile_context>

<pallas_src>
import functools

import jax
import jax.numpy as jnp
from jax.experimental import pallas as pl
from jax.experimental.pallas import tpu as pltpu

BN_EPS = 1e-5


# --------------------------------------------------------------------------
# Stage 1: streaming mean over L  ->  1x1 conv (matmul)  ->  BN  ->  ReLU
# Produces only the tiny (N, C_out) vector.
# --------------------------------------------------------------------------
def _pool_conv_bn_relu_kernel(x_ref, wt_ref, gamma_ref, beta_ref, y_ref,
                              acc_ref, *, total_l, apply_bn, needs_mask):
    # x_ref:     (N, C_in, L_TILE)  native dtype (cast to f32 inside)
    # wt_ref:    (C_in, C_out)      f32, resident across grid steps
    # gamma_ref: (1, C_out)         f32, resident
    # beta_ref:  (1, C_out)         f32, resident
    # y_ref:     (N, C_out)         f32 output (written on last step only)
    # acc_ref:   (N, C_in)          f32 VMEM accumulator (pooled sum)
    l = pl.program_id(0)
    num_l = pl.num_programs(0)

    @pl.when(l == 0)
    def _init():
        acc_ref[...] = jnp.zeros_like(acc_ref)

    x = x_ref[...].astype(jnp.float32)            # (N, C_in, L_TILE)
    l_tile = x.shape[-1]

    if needs_mask:  # static: only when the last L tile is partial
        lane = jax.lax.broadcasted_iota(jnp.int32, x.shape, dimension=2)
        x = jnp.where(l * l_tile + lane < total_l, x, 0.0)

    # VPU chunk-adds down to a single 128-lane slab, then one XLU lane reduce.
    if l_tile > 128 and l_tile % 128 == 0:
        part = x[:, :, :128]
        for c in range(1, l_tile // 128):
            part = part + x[:, :, c * 128:(c + 1) * 128]
    else:
        part = x
    acc_ref[...] += jnp.sum(part, axis=-1)        # (N, C_in)

    @pl.when(l == num_l - 1)
    def _finalize():
        pooled = acc_ref[...] * (1.0 / float(total_l))          # (N, C_in)
        y = jnp.dot(pooled, wt_ref[...],
                    preferred_element_type=jnp.float32)          # (N, C_out)
        if apply_bn:  # static (N > 1): training-mode batchnorm, batch stats
            mu = jnp.mean(y, axis=0, keepdims=True)
            var = jnp.mean((y - mu) * (y - mu), axis=0, keepdims=True)
            y = (y - mu) * jax.lax.rsqrt(var + BN_EPS)
            y = y * gamma_ref[...] + beta_ref[...]
        y_ref[...] = jnp.maximum(y, 0.0)                         # ReLU


# --------------------------------------------------------------------------
# Stage 2: broadcast (N, C_out) -> (N, C_out, L), tiled lane-dense over L.
# (linear interpolation from length 1 to length L is a pure broadcast)
# --------------------------------------------------------------------------
def _broadcast_kernel(y_ref, out_ref):
    y = y_ref[...]                                               # (N, C_out)
    out_ref[...] = jnp.broadcast_to(y[:, :, None],
                                    out_ref.shape).astype(out_ref.dtype)


def _pick_lane_tile(total_l, bytes_per_lane, target_bytes):
    """Largest 128-multiple whose slab fits target_bytes; full L if small."""
    max_tile = (target_bytes // max(bytes_per_lane, 1)) // 128 * 128
    max_tile = max(int(max_tile), 128)
    if total_l <= max_tile:
        return int(total_l)
    return max_tile


def aspp_pooling(x, conv_weight, bn_gamma, bn_beta, *,
                 l_tile=None, bcast_l_tile=None):
    """x: (N, C_in, L); conv_weight: (C_out, C_in, 1); returns (N, C_out, L).

    l_tile / bcast_l_tile: optional overrides (must be a multiple of 128 or
    equal to L) — used for testing the tiled paths at small shapes.
    """
    N, C_in, L = x.shape
    C_out = conv_weight.shape[0]
    out_dtype = x.dtype

    wt = conv_weight[:, :, 0].T.astype(jnp.float32)              # (C_in, C_out)
    gamma = bn_gamma.reshape(1, C_out).astype(jnp.float32)
    beta = bn_beta.reshape(1, C_out).astype(jnp.float32)

    # Generation-aware tile sizing: smaller tiles on v7x (64 MiB VMEM),
    # larger on v5e/v6e (128 MiB).  ~1/16 of VMEM per input buffer leaves
    # headroom for double-buffering + resident weight + scratch.
    try:
        vmem_cap = int(pltpu.get_tpu_info().vmem_capacity_bytes)
    except Exception:  # conservative fallback (v7x-sized)
        vmem_cap = 64 * 1024 * 1024
    target_tile_bytes = max(1 << 22, vmem_cap // 16)
    vmem_limit = int(min(vmem_cap, 128 * 1024 * 1024) * 3 // 4)

    in_itemsize = jnp.dtype(x.dtype).itemsize
    if l_tile is None:
        l_tile = _pick_lane_tile(L, N * C_in * in_itemsize, target_tile_bytes)
    n_l = pl.cdiv(L, l_tile)
    needs_mask = (n_l * l_tile != L)

    # ---- stage 1: reduction + conv + BN + ReLU -> (N, C_out) ----
    # NOTE: N and C_in stay untiled so the batch stats / matmul stay exact.
    # (For extreme N*C_in the next step would be tiling C_in too.)
    kernel = functools.partial(_pool_conv_bn_relu_kernel,
                               total_l=L, apply_bn=(N > 1),
                               needs_mask=needs_mask)
    y = pl.pallas_call(
        kernel,
        out_shape=jax.ShapeDtypeStruct((N, C_out), jnp.float32),
        grid=(n_l,),
        in_specs=[
            pl.BlockSpec((N, C_in, l_tile), lambda l: (0, 0, l)),   # streamed
            pl.BlockSpec((C_in, C_out), lambda l: (0, 0)),          # resident
            pl.BlockSpec((1, C_out), lambda l: (0, 0)),             # resident
            pl.BlockSpec((1, C_out), lambda l: (0, 0)),             # resident
        ],
        out_specs=pl.BlockSpec((N, C_out), lambda l: (0, 0)),
        scratch_shapes=[pltpu.VMEM((N, C_in), jnp.float32)],
        compiler_params=pltpu.CompilerParams(
            dimension_semantics=("arbitrary",),      # L is a reduction axis
            vmem_limit_bytes=vmem_limit),
    )(x, wt, gamma, beta)

    # ---- stage 2: broadcast to (N, C_out, L), lane-dense tiled output ----
    out_itemsize = jnp.dtype(out_dtype).itemsize
    if bcast_l_tile is None:
        bcast_l_tile = _pick_lane_tile(L, N * C_out * out_itemsize,
                                       target_tile_bytes)
    n_lb = pl.cdiv(L, bcast_l_tile)

    out = pl.pallas_call(
        _broadcast_kernel,
        out_shape=jax.ShapeDtypeStruct((N, C_out, L), out_dtype),
        grid=(n_lb,),
        in_specs=[pl.BlockSpec((N, C_out), lambda l: (0, 0))],
        out_specs=pl.BlockSpec((N, C_out, bcast_l_tile), lambda l: (0, 0, l)),
        compiler_params=pltpu.CompilerParams(
            dimension_semantics=("parallel",),       # shard L across TCs (v7x)
            vmem_limit_bytes=vmem_limit),
    )(y)
    return out


# --------------------------------------------------------------------------
# Pure-JAX reference mirroring the PyTorch forward.
# --------------------------------------------------------------------------
def aspp_pooling_ref(x, conv_weight, bn_gamma, bn_beta):
    N, C_in, L = x.shape
    xf = x.astype(jnp.float32)
    pooled = jnp.mean(xf, axis=-1)                               # (N, C_in)
    y = pooled @ conv_weight[:, :, 0].T.astype(jnp.float32)      # (N, C_out)
    if N > 1:
        mu = jnp.mean(y, axis=0, keepdims=True)
        var = jnp.mean((y - mu) ** 2, axis=0, keepdims=True)
        y = (y - mu) / jnp.sqrt(var + BN_EPS) * bn_gamma[None, :] + bn_beta[None, :]
    y = jnp.maximum(y, 0.0)
    return jnp.broadcast_to(y[:, :, None], (N, y.shape[1], L)).astype(x.dtype)


if __name__ == "__main__":
    key = jax.random.PRNGKey(0)

    def run_case(N, C_in, C_out, L, **kw):
        ks = jax.random.split(
            jax.random.fold_in(key, N * 100000 + C_in * 1000 + C_out * 10 + L), 4)
        x = jax.random.normal(ks[0], (N, C_in, L), dtype=jnp.float32)
        w = jax.random.normal(ks[1], (C_out, C_in, 1), dtype=jnp.float32) * 0.1
        g = 1.0 + 0.1 * jax.random.normal(ks[2], (C_out,), dtype=jnp.float32)
        b = 0.1 * jax.random.normal(ks[3], (C_out,), dtype=jnp.float32)

        out = jax.block_until_ready(aspp_pooling(x, w, g, b, **kw))
        ref = aspp_pooling_ref(x, w, g, b)
        assert out.shape == (N, C_out, L)
        assert jnp.allclose(out, ref, atol=1e-4, rtol=1e-4), (
            f"mismatch vs reference: N={N} C_in={C_in} C_out={C_out} L={L}")

    # Single-tile path, BN applied (N > 1).
    run_case(2, 4, 8, 16)
    # BN skipped (N == 1), matching the PyTorch `if x.shape[0] > 1` guard.
    run_case(1, 4, 8, 16)
    # Multi-step L reduction + tiled lane-dense broadcast (tiles divide L).
    run_case(2, 8, 16, 384, l_tile=128, bcast_l_tile=128)
    # VPU chunk-add path (l_tile > 128).
    run_case(2, 8, 16, 512, l_tile=256, bcast_l_tile=256)
    # Partial (masked) last L tile in the reduction.
    run_case(2, 4, 8, 320, l_tile=128)

    print("KERNEL_OK")
</pallas_src>

<mosaic_0001>
module attributes {stable_mosaic.version = 11 : i64} {
  func.func @_pool_conv_bn_relu_kernel(%arg0: i32, %arg1: memref<2x4x16xf32, #tpu.memory_space<vmem>>, %arg2: memref<4x8xf32, #tpu.memory_space<vmem>>, %arg3: memref<1x8xf32, #tpu.memory_space<vmem>>, %arg4: memref<1x8xf32, #tpu.memory_space<vmem>>, %arg5: memref<2x8xf32, #tpu.memory_space<vmem>>, %arg6: memref<2x4xf32, #tpu.memory_space<vmem>>) attributes {dimension_semantics = [#tpu.dimension_semantics<arbitrary>], iteration_bounds = array<i64: 1>, scalar_prefetch = 0 : i64, scratch_operands = 1 : i64, tpu.core_type = #tpu.core_type<tc>, window_params = [{transform_indices = @transform_0, window_bounds = array<i64: 2, 4, 16>}, {pipeline_mode = #tpu.pipeline_mode<synchronous>, transform_indices = @transform_1, window_bounds = array<i64: 4, 8>}, {pipeline_mode = #tpu.pipeline_mode<synchronous>, transform_indices = @transform_2, window_bounds = array<i64: 1, 8>}, {pipeline_mode = #tpu.pipeline_mode<synchronous>, transform_indices = @transform_3, window_bounds = array<i64: 1, 8>}, {pipeline_mode = #tpu.pipeline_mode<synchronous>, transform_indices = @transform_4, window_bounds = array<i64: 2, 8>}]} {
    %c0_i32 = arith.constant 0 : i32
    %0 = arith.cmpi eq, %arg0, %c0_i32 : i32
    %1 = arith.extui %0 : i1 to i32
    %c0_i32_0 = arith.constant 0 : i32
    %2 = arith.cmpi ne, %1, %c0_i32_0 : i32
    scf.if %2 {
      %cst_9 = arith.constant 0.000000e+00 : f32
      %11 = vector.broadcast %cst_9 : f32 to vector<2x4xf32>
      %c0_10 = arith.constant 0 : index
      %c0_11 = arith.constant 0 : index
      %12 = vector.load %arg6[%c0_10, %c0_11] : memref<2x4xf32, #tpu.memory_space<vmem>>, vector<2x4xf32>
      tpu.vector_store %arg6[%c0_10, %c0_11], %11 {strides = array<i32>} : memref<2x4xf32, #tpu.memory_space<vmem>>, vector<2x4xf32>,
    } else {
    }
    %c0 = arith.constant 0 : index
    %c0_1 = arith.constant 0 : index
    %c0_2 = arith.constant 0 : index
    %3 = vector.load %arg1[%c0, %c0_1, %c0_2] : memref<2x4x16xf32, #tpu.memory_space<vmem>>, vector<2x4x16xf32>
    %c0_3 = arith.constant 0 : index
    %c0_4 = arith.constant 0 : index
    %4 = vector.load %arg6[%c0_3, %c0_4] : memref<2x4xf32, #tpu.memory_space<vmem>>, vector<2x4xf32>
    %cst = arith.constant dense<0.000000e+00> : vector<2x4xf32>
    %5 = vector.multi_reduction <add>, %3, %cst [2] : vector<2x4x16xf32> to vector<2x4xf32>
    %6 = arith.addf %4, %5 : vector<2x4xf32>
    %c0_5 = arith.constant 0 : index
    %c0_6 = arith.constant 0 : index
    %7 = vector.load %arg6[%c0_5, %c0_6] : memref<2x4xf32, #tpu.memory_space<vmem>>, vector<2x4xf32>
    tpu.vector_store %arg6[%c0_5, %c0_6], %6 {strides = array<i32>} : memref<2x4xf32, #tpu.memory_space<vmem>>, vector<2x4xf32>,
    %c0_i32_7 = arith.constant 0 : i32
    %8 = arith.cmpi eq, %arg0, %c0_i32_7 : i32
    %9 = arith.extui %8 : i1 to i32
    %c0_i32_8 = arith.constant 0 : i32
    %10 = arith.cmpi ne, %9, %c0_i32_8 : i32
    scf.if %10 {
      %c0_9 = arith.constant 0 : index
      %c0_10 = arith.constant 0 : index
      %11 = vector.load %arg6[%c0_9, %c0_10] : memref<2x4xf32, #tpu.memory_space<vmem>>, vector<2x4xf32>
      %cst_11 = arith.constant 6.250000e-02 : f32
      %12 = vector.broadcast %cst_11 : f32 to vector<2x4xf32>
      %13 = arith.mulf %11, %12 : vector<2x4xf32>
      %c0_12 = arith.constant 0 : index
      %c0_13 = arith.constant 0 : index
      %14 = vector.load %arg2[%c0_12, %c0_13] : memref<4x8xf32, #tpu.memory_space<vmem>>, vector<4x8xf32>
      %cst_14 = arith.constant dense<0.000000e+00> : vector<2x8xf32>
      %15 = tpu.matmul %13, %14, %cst_14 {dimension_numbers = #tpu.dot_dimension_numbers<[1], [0], [0], [1], [0, 0, 1, 1], [], []>} : vector<2x4xf32>, vector<4x8xf32>, vector<2x8xf32> -> vector<2x8xf32>
      %cst_15 = arith.constant dense<0.000000e+00> : vector<8xf32>
      %16 = vector.multi_reduction <add>, %15, %cst_15 [0] : vector<2x8xf32> to vector<8xf32>
      %17 = vector.shape_cast %16 : vector<8xf32> to vector<1x8xf32>
      %cst_16 = arith.constant 2.000000e+00 : f32
      %18 = vector.broadcast %cst_16 : f32 to vector<1x8xf32>
      %19 = arith.divf %17, %18 : vector<1x8xf32>
      %20 = vector.broadcast %19 : vector<1x8xf32> to vector<2x8xf32>
      %21 = arith.subf %15, %20 : vector<2x8xf32>
      %22 = vector.broadcast %19 : vector<1x8xf32> to vector<2x8xf32>
      %23 = arith.subf %15, %22 : vector<2x8xf32>
      %24 = arith.mulf %21, %23 : vector<2x8xf32>
      %cst_17 = arith.constant dense<0.000000e+00> : vector<8xf32>
      %25 = vector.multi_reduction <add>, %24, %cst_17 [0] : vector<2x8xf32> to vector<8xf32>
      %26 = vector.shape_cast %25 : vector<8xf32> to vector<1x8xf32>
      %cst_18 = arith.constant 2.000000e+00 : f32
      %27 = vector.broadcast %cst_18 : f32 to vector<1x8xf32>
      %28 = arith.divf %26, %27 : vector<1x8xf32>
      %29 = vector.broadcast %19 : vector<1x8xf32> to vector<2x8xf32>
      %30 = arith.subf %15, %29 : vector<2x8xf32>
      %cst_19 = arith.constant 9.99999974E-6 : f32
      %31 = vector.broadcast %cst_19 : f32 to vector<1x8xf32>
      %32 = arith.addf %28, %31 : vector<1x8xf32>
      %33 = math.rsqrt %32 : vector<1x8xf32>
      %34 = vector.broadcast %33 : vector<1x8xf32> to vector<2x8xf32>
      %35 = arith.mulf %30, %34 : vector<2x8xf32>
      %c0_20 = arith.constant 0 : index
      %c0_21 = arith.constant 0 : index
      %36 = vector.load %arg3[%c0_20, %c0_21] : memref<1x8xf32, #tpu.memory_space<vmem>>, vector<1x8xf32>
      %37 = vector.broadcast %36 : vector<1x8xf32> to vector<2x8xf32>
      %38 = arith.mulf %35, %37 : vector<2x8xf32>
      %c0_22 = arith.constant 0 : index
      %c0_23 = arith.constant 0 : index
      %39 = vector.load %arg4[%c0_22, %c0_23] : memref<1x8xf32, #tpu.memory_space<vmem>>, vector<1x8xf32>
      %40 = vector.broadcast %39 : vector<1x8xf32> to vector<2x8xf32>
      %41 = arith.addf %38, %40 : vector<2x8xf32>
      %cst_24 = arith.constant 0.000000e+00 : f32
      %42 = vector.broadcast %cst_24 : f32 to vector<2x8xf32>
      %43 = arith.maximumf %41, %42 : vector<2x8xf32>
      %c0_25 = arith.constant 0 : index
      %c0_26 = arith.constant 0 : index
      %44 = vector.load %arg5[%c0_25, %c0_26] : memref<2x8xf32, #tpu.memory_space<vmem>>, vector<2x8xf32>
      tpu.vector_store %arg5[%c0_25, %c0_26], %43 {strides = array<i32>} : memref<2x8xf32, #tpu.memory_space<vmem>>, vector<2x8xf32>,
    } else {
    }
    return
  }
  func.func @transform_0(%arg0: i32) -> (i32, i32, i32) {
    %c0_i32 = arith.constant 0 : i32
    %c0_i32_0 = arith.constant 0 : i32
    %c0_i32_1 = arith.constant 0 : i32
    return %c0_i32, %c0_i32_0, %arg0 : i32, i32, i32
  }
  func.func @transform_1(%arg0: i32) -> (i32, i32) {
    %c0_i32 = arith.constant 0 : i32
    %c0_i32_0 = arith.constant 0 : i32
    %c0_i32_1 = arith.constant 0 : i32
    return %c0_i32, %c0_i32_0 : i32, i32
  }
  func.func @transform_2(%arg0: i32) -> (i32, i32) {
    %c0_i32 = arith.constant 0 : i32
    %c0_i32_0 = arith.constant 0 : i32
    %c0_i32_1 = arith.constant 0 : i32
    return %c0_i32, %c0_i32_0 : i32, i32
  }
  func.func @transform_3(%arg0: i32) -> (i32, i32) {
    %c0_i32 = arith.constant 0 : i32
    %c0_i32_0 = arith.constant 0 : i32
    %c0_i32_1 = arith.constant 0 : i32
    return %c0_i32, %c0_i32_0 : i32, i32
  }
  func.func @transform_4(%arg0: i32) -> (i32, i32) {
    %c0_i32 = arith.constant 0 : i32
    %c0_i32_0 = arith.constant 0 : i32
    %c0_i32_1 = arith.constant 0 : i32
    return %c0_i32, %c0_i32_0 : i32, i32
  }
}

</mosaic_0001>

<llo_original>
// kernel: tpu_custom_call.1
$region0: #{tpu_custom_call.1}
  #allocation0 [shape = 'u32[]', space=smem, size = 0x4, offset = 0x4, fixed_abs, tag = 'smem constant byte address 0x4 - core index']
  #allocation1 [shape = 'u32[144,128]{1,0:T(1,128)}', space=vmem, size = 0x12000, scoped, tag = 'internal scratch']
  #allocation2 [shape = 'f32[2,4]{1,0:T(2,128)}', space=vmem, size = 0x400, scoped, tag = 'scratch operand']
  %s0 = inlined_call_operand.hbm [shape: f32[2,4,16], index: 0, kind: input, shape index: {}]
  %s1 = inlined_call_operand.hbm [shape: f32[4,8], index: 1, kind: input, shape index: {}]
  %s2 = inlined_call_operand.vmem [shape: f32[1,8], index: 2, kind: input, shape index: {}]
  %s3 = inlined_call_operand.vmem [shape: f32[1,8], index: 3, kind: input, shape index: {}]
  %s4 = inlined_call_operand.hbm [shape: f32[2,8], index: 4, kind: output, shape index: {}]
  %s5 = sld [smem:[#allocation0]]
  $region42: #{tpu_custom_call.1} parent=0
    _
  %s7 = ssub.s32 1, %s5
  %s8 = scalar_select 0, %s7, %s5
  $region1: #{tpu_custom_call.1} parent=0
    #allocation3 [shape = 'u8[4096]{0}', space=vmem, size = 0x1000, scoped, tag = 'input window, operand 0, single buffered']
    #allocation4 [shape = 's32[1]{0}', space=sflag, size = 0x4, scoped, tag = 'scoped memory for tpu_custom_call.1']
    #allocation5 [shape = 's32[1]{0}', space=sflag, size = 0x4, scoped, tag = 'scoped memory for tpu_custom_call.1']
    #allocation6 [shape = 'u8[2048]{0}', space=vmem, size = 0x800, scoped, tag = 'input window, operand 1, single buffered']
    #allocation7 [shape = 's32[1]{0}', space=sflag, size = 0x4, scoped, tag = 'scoped memory for tpu_custom_call.1']
    #allocation8 [shape = 'u8[1024]{0}', space=vmem, size = 0x400, scoped, tag = 'output window, operand 0, single buffered']
    %9 = vsyncpa [#allocation4], 0
    %10 = vsyncpa [#allocation7], 0
    %11 = vsyncpa [#allocation5], 0
    // Predicated region
    $region2: #{tpu_custom_call.1} parent=1 // pred_check
      _
    $region3: #{tpu_custom_call.1} parent=1 // pred_check_branch
      %13 = sbr.rel (0) target = $region5
    $region4: #{tpu_custom_call.1} parent=1 // pred_region
      %s15 = ssub.s32 128, 128
      %16 = vsyncadd [#allocation4], %s15
      %s17 = sshll.u32 [#allocation3], 4
      %s18 = int_to_ptr.vmem [resolvable:$true] %s17
      %23 = dma.hbm_to_vmem [thread:$0]  %s0, 128, %s18, [#allocation4], 64, 64, 4
    $region5: #{tpu_custom_call.1} parent=1 // pred_fallthru
      _
    // Predicated region
    $region6: #{tpu_custom_call.1} parent=1 // pred_check
      _
    $region7: #{tpu_custom_call.1} parent=1 // pred_check_branch
      %25 = sbr.rel (0) target = $region9
    $region8: #{tpu_custom_call.1} parent=1 // pred_region
      %s27 = ssub.s32 64, 64
      %28 = vsyncadd [#allocation7], %s27
      %s30 = sshll.u32 [#allocation6], 4
      %s31 = int_to_ptr.vmem [resolvable:$true] %s30
      %33 = dma.hbm_to_vmem [thread:$0]  %s1, 64, %s31, [#allocation7]
    $region9: #{tpu_custom_call.1} parent=1 // pred_fallthru
      _
    // Predicated region
    $region10: #{tpu_custom_call.1} parent=1 // pred_check
      _
    $region11: #{tpu_custom_call.1} parent=1 // pred_check_branch
      %35 = sbr.rel (0) target = $region13
    $region12: #{tpu_custom_call.1} parent=1 // pred_region
      _
    $region13: #{tpu_custom_call.1} parent=1 // pred_fallthru
      _
    // Predicated region
    $region14: #{tpu_custom_call.1} parent=1 // pred_check
      _
    $region15: #{tpu_custom_call.1} parent=1 // pred_check_branch
      %37 = sbr.rel (0) target = $region17
    $region16: #{tpu_custom_call.1} parent=1 // pred_region
      _
    $region17: #{tpu_custom_call.1} parent=1 // pred_fallthru
      _
    // Predicated region
    $region18: #{tpu_custom_call.1} parent=1 // pred_check
      _
    $region19: #{tpu_custom_call.1} parent=1 // pred_check_branch
      %39 = sbr.rel (0) target = $region21
    $region20: #{tpu_custom_call.1} parent=1 // pred_region
      %40 = dma.done [#allocation4], 128
    $region21: #{tpu_custom_call.1} parent=1 // pred_fallthru
      _
    // Predicated region
    $region22: #{tpu_custom_call.1} parent=1 // pred_check
      _
    $region23: #{tpu_custom_call.1} parent=1 // pred_check_branch
      %42 = sbr.rel (0) target = $region25
    $region24: #{tpu_custom_call.1} parent=1 // pred_region
      %43 = dma.done [#allocation7], 64
    $region25: #{tpu_custom_call.1} parent=1 // pred_fallthru
      _
    %p44 = scmp.eq.s32.totalorder 0, 0
    // Predicated region
    $region26: #{tpu_custom_call.1} parent=1 // pred_check
      %p45 = pneg %p44
    $region27: #{tpu_custom_call.1} parent=1 // pred_check_branch
      %47 = sbr.rel (%p45) target = $region29
    $region28: #{tpu_custom_call.1} parent=1 // pred_region
      %vm48 = vcmask 25600
      %49 = vst.msk [vmem:[#allocation2] sm:$0x3] %vm48, 0.0
    $region29: #{tpu_custom_call.1} parent=1 // pred_fallthru
      _
    %v50 = vld [vmem:[#allocation3] sm:$0xf]
    %v51 = vld [vmem:[#allocation3 + $0x4] sm:$0xf]
    %v52 = vld [vmem:[#allocation2] sm:$0x3]
    %vm53 = vcmask 125952
    %v54 = vsel %vm53, %v50, 0.0
    %55 = vadd.xlane.f32.xlu0 %v54
    %v56 = vpop.xlane.xlu0 %55
    %v57 = vsel %vm53, %v51, 0.0
    %58 = vadd.xlane.f32.xlu0 %v57
    %v59 = vpop.xlane.xlu0 %58
    %v62 = vlaneseq
    %v63 = vand.u32 %v62, 127
    %v64 = vlaneseq
    %v65 = vshrl.u32 %v64, 7
    %v66 = vsub.s32 %v63, %v65
    %v67 = vrot.slane %v56, %v66
    %v68 = vlaneseq
    %v69 = vshrl.u32 %v68, 7
    %v70 = vsub.s32 %v63, %v69
    %v71 = vrot.slane %v59, %v70
    %vm72 = vcmask 1041409
    %v73 = vsel %vm72, %v71, %v67
    %v75 = vadd.f32 %v52, %v73
    %vm76 = vcmask 25600
    %77 = vst.msk [vmem:[#allocation2] sm:$0x3] %vm76, %v75
    // Predicated region
    $region30: #{tpu_custom_call.1} parent=1 // pred_check
      %p78 = pneg %p44
    $region31: #{tpu_custom_call.1} parent=1 // pred_check_branch
      %80 = sbr.rel (%p78) target = $region33
    $region32: #{tpu_custom_call.1} parent=1 // pred_region
      %v81 = vld [vmem:[#allocation2] sm:$0x3]
      %v82 = vmul.f32 %v81, 0.0625
      %v83 = vld [vmem:[#allocation6] sm:$0xf]
      %vm84 = vcmask 31744
      %v86 = vsel %vm84, %v82, 0
      %vm88 = vcmask 1043456
      %v90 = vsel %vm88, %v83, 0
      %92 = vmatprep.subr.mxu0 0.0
      %93 = vmatpush1.msra.mxu0 %v90
      %94 = vmatprep.subr.mxu0 0.0
      %95 = vmatpush1.msra.mxu0 0.0
      %96 = vmatprep.subr.mxu0 0.0
      %97 = vmatpush1.msra.mxu0 0.0
      %98 = vmatprep.subr.mxu0 0.0
      %99 = vmatpush1.msra.mxu0 0.0
      %100 = vmatprep.subr.mxu0 0.0
      %101 = vmatpush1.msra.mxu0 0.0
      %102 = vmatprep.subr.mxu0 0.0
      %103 = vmatpush1.msra.mxu0 0.0
      %104 = vmatprep.subr.mxu0 0.0
      %105 = vmatpush1.msra.mxu0 0.0
      %106 = vmatprep.subr.mxu0 0.0
      %107 = vmatpush1.msra.mxu0 0.0
      %108 = vmatprep.subr.mxu0 0.0
      %109 = vmatpush1.msra.mxu0 0.0
      %110 = vmatprep.subr.mxu0 0.0
      %111 = vmatpush1.msra.mxu0 0.0
      %112 = vmatprep.subr.mxu0 0.0
      %113 = vmatpush1.msra.mxu0 0.0
      %114 = vmatprep.subr.mxu0 0.0
      %115 = vmatpush1.msra.mxu0 0.0
      %116 = vmatprep.subr.mxu0 0.0
      %117 = vmatpush1.msra.mxu0 0.0
      %118 = vmatprep.subr.mxu0 0.0
      %119 = vmatpush1.msra.mxu0 0.0
      %120 = vmatprep.subr.mxu0 0.0
      %121 = vmatpush1.msra.mxu0 0.0
      %122 = vmatprep.subr.mxu0 0.0
      %123 = vmatpush1.msra.mxu0 0.0
      %124 = vmatprep.subr.mxu0 0.0
      %125 = vmatpush1.msra.mxu0 0.0
      %126 = vmatprep.subr.mxu0 0.0
      %127 = vmatpush1.msra.mxu0 0.0
      %128 = vmatprep.subr.mxu0 0.0
      %129 = vmatpush1.msra.mxu0 0.0
      %130 = vmatprep.subr.mxu0 0.0
      %131 = vmatpush1.msra.mxu0 0.0
      %132 = vmatprep.subr.mxu0 0.0
      %133 = vmatpush1.msra.mxu0 0.0
      %134 = vmatprep.subr.mxu0 0.0
      %135 = vmatpush1.msra.mxu0 0.0
      %136 = vmatprep.subr.mxu0 0.0
      %137 = vmatpush1.msra.mxu0 0.0
      %138 = vmatprep.subr.mxu0 0.0
      %139 = vmatpush1.msra.mxu0 0.0
      %140 = vmatprep.subr.mxu0 0.0
      %141 = vmatpush1.msra.mxu0 0.0
      %142 = vmatprep.subr.mxu0 0.0
      %143 = vmatpush1.msra.mxu0 0.0
      %144 = vmatprep.subr.mxu0 0.0
      %145 = vmatpush1.msra.mxu0 0.0
      %146 = vmatprep.subr.mxu0 0.0
      %147 = vmatpush1.msra.mxu0 0.0
      %148 = vmatprep.subr.mxu0 0.0
      %149 = vmatpush1.msra.mxu0 0.0
      %150 = vmatprep.subr.mxu0 0.0
      %151 = vmatpush1.msra.mxu0 0.0
      %152 = vmatprep.subr.mxu0 0.0
      %153 = vmatpush1.msra.mxu0 0.0
      %154 = vmatprep.subr.mxu0 0.0
      %155 = vmatpush1.msra.mxu0 0.0
      %156 = vmatprep.mubr.f32.mxu0 0.0
      %157 = vmatmul.mubr.f32.gmra.mrb[0].mxu0 %v86
      %v158 = vpop.f32.mrb[0].mxu0
      %v159 = vadd.f32 0.0, %v158
      %v160 = vpop.f32.mrb[0].mxu0
      %161 = vdwg.mxu0
      %vm162 = vcmask 58368
      %v163 = vsel %vm162, %v159, 0.0
      %v164 = vrot.slane %v163, 4
      %v165 = vadd.f32 %v163, %v164
      %v166 = vrot.slane %v165, 2
      %v167 = vadd.f32 %v165, %v166
      %v168 = vrot.slane %v167, 1
      %v169 = vadd.f32 %v167, %v168
      %v170 = vrcp.pop 2.0
      %v171 = vmul.f32 %v169, %v170
      %v172 = vsub.f32 %v159, %v171
      %v173 = vmul.f32 %v172, %v172
      %v174 = vsel %vm162, %v173, 0.0
      %v175 = vrot.slane %v174, 4
      %v176 = vadd.f32 %v174, %v175
      %v177 = vrot.slane %v176, 2
      %v178 = vadd.f32 %v176, %v177
      %v179 = vrot.slane %v178, 1
      %v180 = vadd.f32 %v178, %v179
      %v181 = vmul.f32 %v180, %v170
      %v182 = vadd.f32 %v181, 1e-05
      %v183 = vrsqrt.pop %v182
      %v184 = vmul.f32 %v172, %v183
      %v185 = vld [vmem:[%s2] sm:$0x1]
      %v187 = vlaneseq
      %v188 = vshrl.u32 %v187, 7
      %v189 = vsub.s32 0, %v188
      %v190 = vrot.slane %v185, %v189
      %v192 = vmul.f32 %v184, %v190
      %v193 = vld [vmem:[%s3] sm:$0x1]
      %v195 = vlaneseq
      %v196 = vshrl.u32 %v195, 7
      %v197 = vsub.s32 0, %v196
      %v198 = vrot.slane %v193, %v197
      %v200 = vadd.f32 %v192, %v198
      %v201 = vmax.f32 %v200, 0.0
      %202 = vst.msk [vmem:[#allocation8] sm:$0x3] %vm162, %v201
    $region33: #{tpu_custom_call.1} parent=1 // pred_fallthru
      _
    // Predicated region
    $region34: #{tpu_custom_call.1} parent=1 // pred_check
      _
    $region35: #{tpu_custom_call.1} parent=1 // pred_check_branch
      %204 = sbr.rel (0) target = $region37
    $region36: #{tpu_custom_call.1} parent=1 // pred_region
      %s206 = ssub.s32 32, 32
      %207 = vsyncadd [#allocation5], %s206
      %s209 = sshll.u32 [#allocation8], 4
      %s210 = int_to_ptr.vmem [resolvable:$true] %s209
      %212 = dma.vmem_to_hbm [thread:$0]  %s210, 32, %s4, [#allocation5]
    $region37: #{tpu_custom_call.1} parent=1 // pred_fallthru
      _
    // Predicated region
    $region38: #{tpu_custom_call.1} parent=1 // pred_check
      _
    $region39: #{tpu_custom_call.1} parent=1 // pred_check_branch
      %214 = sbr.rel (0) target = $region41
    $region40: #{tpu_custom_call.1} parent=1 // pred_region
      %215 = dma.done [#allocation5], 32
    $region41: #{tpu_custom_call.1} parent=1 // pred_fallthru
      _
    %216 = vsyncpa [#allocation4], 1
    %217 = vsyncpa [#allocation7], 1
    %218 = vsyncpa [#allocation5], 1

</llo_original>
